<compile_context>
chip_gen: v7x
topology: tpu7x:2x2x1
jax: 0.10.0
libtpu: 0.0.40
codegen_flags: <defaults>
</compile_context>

<pallas_src>
import functools

import jax
import jax.numpy as jnp
from jax.experimental import pallas as pl
from jax.experimental.pallas import tpu as pltpu

EPS = 1e-5

# Keep below v7x's 64 MiB physical VMEM per TensorCore.
_VMEM_CAP_BYTES = 64 * 1024 * 1024
# Data budget (blocks + temporaries) we are willing to use for tiling.
_VMEM_DATA_BUDGET_BYTES = 40 * 1024 * 1024


def _make_groupnorm1_kernel(act):
    """Per-block GroupNorm(1, C) kernel over (TB, C, HW), optionally fusing an
    elementwise activation `act` as an epilogue."""

    def kernel(x_ref, w_ref, b_ref, o_ref):
        x = x_ref[...]                      # (TB, C, HW), native dtype
        xf = x.astype(jnp.float32)
        # Block covers full (C, HW) of each sample, so n is exact.
        n = x.shape[-2] * x.shape[-1]
        inv_n = 1.0 / n

        # One-pass per-sample reduction in f32: lane-reduce then sublane-reduce.
        s = jnp.sum(xf, axis=2, keepdims=True)            # (TB, C, 1)
        s = jnp.sum(s, axis=1, keepdims=True)             # (TB, 1, 1)
        ss = jnp.sum(xf * xf, axis=2, keepdims=True)      # (TB, C, 1)
        ss = jnp.sum(ss, axis=1, keepdims=True)           # (TB, 1, 1)

        mean = s * inv_n
        var = jnp.maximum(ss * inv_n - mean * mean, 0.0)
        inv = jax.lax.rsqrt(var + EPS)                    # EUP slot

        # Fold normalization + per-channel affine into one FMA:
        #   y = x * (w * inv) + (b - mean * w * inv)
        scale = w_ref[...] * inv            # (1,C,1)*(TB,1,1) -> (TB, C, 1)
        shift = b_ref[...] - mean * scale   # (TB, C, 1)

        y = xf * scale + shift              # broadcast over HW (VPU)
        if act is not None:
            y = act(y)                      # fused elementwise epilogue
        o_ref[...] = y.astype(o_ref.dtype)

    return kernel


def _pick_batch_block(B, per_sample_bytes):
    """Largest divisor of B whose block fits the VMEM data budget."""
    cap = max(1, _VMEM_DATA_BUDGET_BYTES // max(per_sample_bytes, 1))
    cap = min(cap, B)
    for tb in range(cap, 0, -1):
        if B % tb == 0:
            return tb
    return 1


@functools.partial(jax.jit, static_argnames=("act",))
def groupnorm1(x_nchw, weight, bias, act=None):
    """GroupNorm(num_groups=1, num_channels=C) on NCHW input via Pallas.

    If `act` (a jnp-traceable elementwise callable) is given, it is fused into
    the kernel as an epilogue so the norm+activation pair costs one HBM read +
    one HBM write instead of two of each.
    """
    B, C, H, W = x_nchw.shape
    HW = H * W
    x = x_nchw.reshape(B, C, HW)
    # Pre-shape affine params to (1, C, 1) in f32 so the kernel applies them
    # without any in-kernel reshape/relayout.
    w3 = weight.reshape(1, C, 1).astype(jnp.float32)
    b3 = bias.reshape(1, C, 1).astype(jnp.float32)

    itemsize = x.dtype.itemsize
    # Per-sample VMEM footprint: double-buffered input + output blocks plus
    # the f32 temporaries (xf, y) the kernel materializes.
    per_sample_bytes = C * HW * (4 * itemsize + 8)
    tb = _pick_batch_block(B, per_sample_bytes)
    # TODO(synk): for a single sample too large for VMEM even at tb=1, fall
    # back to a two-pass tiled scheme over HW (pass 1: sum/sum(x^2); pass 2:
    # apply folded scale/shift tile-by-tile).

    needed = tb * per_sample_bytes + (2 << 20)  # + headroom for params etc.
    vmem_limit = int(min(_VMEM_CAP_BYTES, max(needed, 4 * 1024 * 1024)))

    out = pl.pallas_call(
        _make_groupnorm1_kernel(act),
        out_shape=jax.ShapeDtypeStruct((B, C, HW), x.dtype),
        grid_spec=pltpu.PrefetchScalarGridSpec(
            num_scalar_prefetch=0,
            grid=(B // tb,),
            in_specs=[
                pl.BlockSpec((tb, C, HW), lambda i: (i, 0, 0)),
                # Constant index_map -> fetched once, not re-DMA'd per step.
                pl.BlockSpec((1, C, 1), lambda i: (0, 0, 0)),
                pl.BlockSpec((1, C, 1), lambda i: (0, 0, 0)),
            ],
            out_specs=pl.BlockSpec((tb, C, HW), lambda i: (i, 0, 0)),
        ),
        compiler_params=pltpu.CompilerParams(
            dimension_semantics=("parallel",),
            vmem_limit_bytes=vmem_limit,
        ),
    )(x, w3, b3)
    return out.reshape(B, C, H, W)


class PreNorm:
    """JAX/Pallas port of the PyTorch PreNorm module (GroupNorm(1, dim) -> fn).

    If `fn_is_elementwise=True`, `fn` is fused into the Pallas kernel as an
    epilogue; otherwise it is applied as a plain JAX callable afterwards.
    """

    def __init__(self, dim, fn, key=None, fn_is_elementwise=False):
        self.fn = fn
        self.fn_is_elementwise = fn_is_elementwise
        if key is None:
            # PyTorch default GroupNorm init: weight=1, bias=0.
            self.weight = jnp.ones((dim,), jnp.float32)
            self.bias = jnp.zeros((dim,), jnp.float32)
        else:
            kw, kb = jax.random.split(key)
            self.weight = jax.random.normal(kw, (dim,), jnp.float32)
            self.bias = jax.random.normal(kb, (dim,), jnp.float32)

    def __call__(self, x):
        if self.fn_is_elementwise:
            return groupnorm1(x, self.weight, self.bias, act=self.fn)
        x = groupnorm1(x, self.weight, self.bias)
        # TODO(synk): `fn` is an arbitrary wrapped sub-module in the original
        # code (e.g. Attention); non-elementwise fns are applied here as a
        # plain JAX callable rather than fused into the kernel.
        return self.fn(x)


def _reference_groupnorm1(x, weight, bias):
    B, C, H, W = x.shape
    xf = x.reshape(B, -1).astype(jnp.float32)
    mean = xf.mean(axis=1, keepdims=True)
    var = ((xf - mean) ** 2).mean(axis=1, keepdims=True)
    xn = (xf - mean) / jnp.sqrt(var + EPS)
    xn = xn.reshape(B, C, H, W)
    return xn * weight.reshape(1, C, 1, 1) + bias.reshape(1, C, 1, 1)


if __name__ == "__main__":
    key = jax.random.PRNGKey(0)
    kx, kp, kx2 = jax.random.split(key, 3)

    B, C, H, W = 2, 4, 16, 16
    x = jax.random.normal(kx, (B, C, H, W), jnp.float32)

    # fn: simple elementwise callable standing in for the wrapped sub-module;
    # fused into the kernel epilogue.
    module = PreNorm(C, fn=jax.nn.gelu, key=kp, fn_is_elementwise=True)

    out = module(x)
    out = jax.block_until_ready(out)

    ref_norm = _reference_groupnorm1(x, module.weight, module.bias)
    ref = jax.nn.gelu(ref_norm)
    assert out.shape == (B, C, H, W)
    assert jnp.allclose(out, ref, atol=1e-5, rtol=1e-5)

    # Non-fused (norm only) path.
    norm_only = jax.block_until_ready(groupnorm1(x, module.weight, module.bias))
    assert jnp.allclose(norm_only, ref_norm, atol=1e-5, rtol=1e-5)

    # Odd batch / different spatial size to exercise the batch-blocking logic.
    B2, C2, H2, W2 = 3, 8, 8, 8
    x2 = jax.random.normal(kx2, (B2, C2, H2, W2), jnp.float32)
    w2 = jnp.linspace(0.5, 1.5, C2, dtype=jnp.float32)
    b2 = jnp.linspace(-0.25, 0.25, C2, dtype=jnp.float32)
    out2 = jax.block_until_ready(groupnorm1(x2, w2, b2))
    ref2 = _reference_groupnorm1(x2, w2, b2)
    assert jnp.allclose(out2, ref2, atol=1e-5, rtol=1e-5)

    print("KERNEL_OK")
</pallas_src>

<mosaic_0001>
module attributes {stable_mosaic.version = 11 : i64} {
  func.func @kernel(%arg0: i32, %arg1: memref<2x4x256xf32, #tpu.memory_space<vmem>>, %arg2: memref<1x4x1xf32, #tpu.memory_space<vmem>>, %arg3: memref<1x4x1xf32, #tpu.memory_space<vmem>>, %arg4: memref<2x4x256xf32, #tpu.memory_space<vmem>>) attributes {dimension_semantics = [#tpu.dimension_semantics<parallel>], iteration_bounds = array<i64: 1>, scalar_prefetch = 0 : i64, scratch_operands = 0 : i64, tpu.core_type = #tpu.core_type<tc>, window_params = [{transform_indices = @transform_0, window_bounds = array<i64: 2, 4, 256>}, {pipeline_mode = #tpu.pipeline_mode<synchronous>, transform_indices = @transform_1, window_bounds = array<i64: 1, 4, 1>}, {pipeline_mode = #tpu.pipeline_mode<synchronous>, transform_indices = @transform_2, window_bounds = array<i64: 1, 4, 1>}, {transform_indices = @transform_3, window_bounds = array<i64: 2, 4, 256>}]} {
    %c0 = arith.constant 0 : index
    %c0_0 = arith.constant 0 : index
    %c0_1 = arith.constant 0 : index
    %0 = vector.load %arg1[%c0, %c0_0, %c0_1] : memref<2x4x256xf32, #tpu.memory_space<vmem>>, vector<2x4x256xf32>
    %cst = arith.constant dense<0.000000e+00> : vector<2x4xf32>
    %1 = vector.multi_reduction <add>, %0, %cst [2] : vector<2x4x256xf32> to vector<2x4xf32>
    %2 = vector.shape_cast %1 : vector<2x4xf32> to vector<2x4x1xf32>
    %cst_2 = arith.constant dense<0.000000e+00> : vector<2x1xf32>
    %3 = vector.multi_reduction <add>, %2, %cst_2 [1] : vector<2x4x1xf32> to vector<2x1xf32>
    %4 = vector.shape_cast %3 : vector<2x1xf32> to vector<2x1x1xf32>
    %5 = arith.mulf %0, %0 : vector<2x4x256xf32>
    %cst_3 = arith.constant dense<0.000000e+00> : vector<2x4xf32>
    %6 = vector.multi_reduction <add>, %5, %cst_3 [2] : vector<2x4x256xf32> to vector<2x4xf32>
    %7 = vector.shape_cast %6 : vector<2x4xf32> to vector<2x4x1xf32>
    %cst_4 = arith.constant dense<0.000000e+00> : vector<2x1xf32>
    %8 = vector.multi_reduction <add>, %7, %cst_4 [1] : vector<2x4x1xf32> to vector<2x1xf32>
    %9 = vector.shape_cast %8 : vector<2x1xf32> to vector<2x1x1xf32>
    %cst_5 = arith.constant 9.765625E-4 : f32
    %10 = vector.broadcast %cst_5 : f32 to vector<2x1x1xf32>
    %11 = arith.mulf %4, %10 : vector<2x1x1xf32>
    %cst_6 = arith.constant 9.765625E-4 : f32
    %12 = vector.broadcast %cst_6 : f32 to vector<2x1x1xf32>
    %13 = arith.mulf %9, %12 : vector<2x1x1xf32>
    %14 = arith.mulf %11, %11 : vector<2x1x1xf32>
    %15 = arith.subf %13, %14 : vector<2x1x1xf32>
    %cst_7 = arith.constant 0.000000e+00 : f32
    %16 = vector.broadcast %cst_7 : f32 to vector<2x1x1xf32>
    %17 = arith.maximumf %15, %16 : vector<2x1x1xf32>
    %cst_8 = arith.constant 9.99999974E-6 : f32
    %18 = vector.broadcast %cst_8 : f32 to vector<2x1x1xf32>
    %19 = arith.addf %17, %18 : vector<2x1x1xf32>
    %20 = math.rsqrt %19 : vector<2x1x1xf32>
    %c0_9 = arith.constant 0 : index
    %c0_10 = arith.constant 0 : index
    %c0_11 = arith.constant 0 : index
    %21 = vector.load %arg2[%c0_9, %c0_10, %c0_11] : memref<1x4x1xf32, #tpu.memory_space<vmem>>, vector<1x4x1xf32>
    %22 = vector.broadcast %21 : vector<1x4x1xf32> to vector<2x4x1xf32>
    %23 = vector.broadcast %20 : vector<2x1x1xf32> to vector<2x4x1xf32>
    %24 = arith.mulf %22, %23 : vector<2x4x1xf32>
    %c0_12 = arith.constant 0 : index
    %c0_13 = arith.constant 0 : index
    %c0_14 = arith.constant 0 : index
    %25 = vector.load %arg3[%c0_12, %c0_13, %c0_14] : memref<1x4x1xf32, #tpu.memory_space<vmem>>, vector<1x4x1xf32>
    %26 = vector.broadcast %11 : vector<2x1x1xf32> to vector<2x4x1xf32>
    %27 = arith.mulf %26, %24 : vector<2x4x1xf32>
    %28 = vector.broadcast %25 : vector<1x4x1xf32> to vector<2x4x1xf32>
    %29 = arith.subf %28, %27 : vector<2x4x1xf32>
    %30 = vector.broadcast %24 : vector<2x4x1xf32> to vector<2x4x256xf32>
    %31 = arith.mulf %0, %30 : vector<2x4x256xf32>
    %32 = vector.broadcast %29 : vector<2x4x1xf32> to vector<2x4x256xf32>
    %33 = arith.addf %31, %32 : vector<2x4x256xf32>
    %34 = arith.mulf %33, %33 : vector<2x4x256xf32>
    %35 = arith.mulf %33, %34 : vector<2x4x256xf32>
    %cst_15 = arith.constant 4.471500e-02 : f32
    %36 = vector.broadcast %cst_15 : f32 to vector<2x4x256xf32>
    %37 = arith.mulf %36, %35 : vector<2x4x256xf32>
    %38 = arith.addf %33, %37 : vector<2x4x256xf32>
    %cst_16 = arith.constant 0.797884583 : f32
    %39 = vector.broadcast %cst_16 : f32 to vector<2x4x256xf32>
    %40 = arith.mulf %39, %38 : vector<2x4x256xf32>
    %41 = math.tanh %40 : vector<2x4x256xf32>
    %cst_17 = arith.constant 1.000000e+00 : f32
    %42 = vector.broadcast %cst_17 : f32 to vector<2x4x256xf32>
    %43 = arith.addf %42, %41 : vector<2x4x256xf32>
    %cst_18 = arith.constant 5.000000e-01 : f32
    %44 = vector.broadcast %cst_18 : f32 to vector<2x4x256xf32>
    %45 = arith.mulf %44, %43 : vector<2x4x256xf32>
    %46 = arith.mulf %33, %45 : vector<2x4x256xf32>
    %c0_19 = arith.constant 0 : index
    %c0_20 = arith.constant 0 : index
    %c0_21 = arith.constant 0 : index
    %47 = vector.load %arg4[%c0_19, %c0_20, %c0_21] : memref<2x4x256xf32, #tpu.memory_space<vmem>>, vector<2x4x256xf32>
    tpu.vector_store %arg4[%c0_19, %c0_20, %c0_21], %46 {strides = array<i32>} : memref<2x4x256xf32, #tpu.memory_space<vmem>>, vector<2x4x256xf32>,
    return
  }
  func.func @transform_0(%arg0: i32) -> (i32, i32, i32) {
    %c0_i32 = arith.constant 0 : i32
    %c0_i32_0 = arith.constant 0 : i32
    %c0_i32_1 = arith.constant 0 : i32
    return %arg0, %c0_i32, %c0_i32_0 : i32, i32, i32
  }
  func.func @transform_1(%arg0: i32) -> (i32, i32, i32) {
    %c0_i32 = arith.constant 0 : i32
    %c0_i32_0 = arith.constant 0 : i32
    %c0_i32_1 = arith.constant 0 : i32
    %c0_i32_2 = arith.constant 0 : i32
    return %c0_i32, %c0_i32_0, %c0_i32_1 : i32, i32, i32
  }
  func.func @transform_2(%arg0: i32) -> (i32, i32, i32) {
    %c0_i32 = arith.constant 0 : i32
    %c0_i32_0 = arith.constant 0 : i32
    %c0_i32_1 = arith.constant 0 : i32
    %c0_i32_2 = arith.constant 0 : i32
    return %c0_i32, %c0_i32_0, %c0_i32_1 : i32, i32, i32
  }
  func.func @transform_3(%arg0: i32) -> (i32, i32, i32) {
    %c0_i32 = arith.constant 0 : i32
    %c0_i32_0 = arith.constant 0 : i32
    %c0_i32_1 = arith.constant 0 : i32
    return %arg0, %c0_i32, %c0_i32_0 : i32, i32, i32
  }
}

</mosaic_0001>

<llo_original>
// kernel: groupnorm1.1
$region0: #{groupnorm1.1}
  #allocation0 [shape = 'u32[]', space=smem, size = 0x4, offset = 0x4, fixed_abs, tag = 'smem constant byte address 0x4 - core index']
  #allocation1 [shape = 'u32[144,128]{1,0:T(1,128)}', space=vmem, size = 0x12000, scoped, tag = 'internal scratch']
  %s0 = inlined_call_operand.vmem [shape: f32[2,4,256], index: 0, kind: input, shape index: {}]
  %s1 = inlined_call_operand.vmem [shape: f32[1,4,1], index: 1, kind: input, shape index: {}]
  %s2 = inlined_call_operand.vmem [shape: f32[1,4,1], index: 2, kind: input, shape index: {}]
  %s3 = inlined_call_operand.vmem [shape: f32[2,4,256], index: 3, kind: output, shape index: {}]
  %s4 = sld [smem:[#allocation0]]
  $region22: #{groupnorm1.1} parent=0
    _
  %s6 = ssub.s32 1, %s4
  %s7 = scalar_select 0, %s6, %s4
  // Predicated region
  $region2: #{groupnorm1.1} parent=0 // pred_check
    _
  $region3: #{groupnorm1.1} parent=0 // pred_check_branch
    %9 = sbr.rel (0) target = $region5
  $region4: #{groupnorm1.1} parent=0 // pred_region
    _
  $region5: #{groupnorm1.1} parent=0 // pred_fallthru
    _
  // Predicated region
  $region6: #{groupnorm1.1} parent=0 // pred_check
    _
  $region7: #{groupnorm1.1} parent=0 // pred_check_branch
    %11 = sbr.rel (0) target = $region9
  $region8: #{groupnorm1.1} parent=0 // pred_region
    _
  $region9: #{groupnorm1.1} parent=0 // pred_fallthru
    _
  // Predicated region
  $region10: #{groupnorm1.1} parent=0 // pred_check
    _
  $region11: #{groupnorm1.1} parent=0 // pred_check_branch
    %13 = sbr.rel (0) target = $region13
  $region12: #{groupnorm1.1} parent=0 // pred_region
    _
  $region13: #{groupnorm1.1} parent=0 // pred_fallthru
    _
  %v14 = vld [vmem:[%s0] sm:$0xff]
  %v15 = vld [vmem:[%s0 + $0x8] sm:$0xff]
  %v18 = vcombine.high %v14, %v14
  %v19 = vcombine.high %v15, %v15
  %vm22 = vcmask 1043456
  %v23 = vsel %vm22, %v14, 0.0
  %v24 = vsel %vm22, %v18, 0.0
  %v25 = vadd.f32 %v23, %v24
  %26 = vadd.xlane.f32.xlu0 %v25
  %v27 = vpop.xlane.xlu0 %26
  %v28 = vsel %vm22, %v15, 0.0
  %v29 = vsel %vm22, %v19, 0.0
  %v30 = vadd.f32 %v28, %v29
  %31 = vadd.xlane.f32.xlu0 %v30
  %v32 = vpop.xlane.xlu0 %31
  %v33 = vsel %vm22, %v27, 0.0
  %v34 = vrot.slane %v33, 4
  %v35 = vadd.f32 %v33, %v34
  %v36 = vrot.slane %v35, 2
  %v37 = vadd.f32 %v35, %v36
  %v38 = vrot.slane %v37, 1
  %v39 = vadd.f32 %v37, %v38
  %v40 = vsel %vm22, %v32, 0.0
  %v41 = vrot.slane %v40, 4
  %v42 = vadd.f32 %v40, %v41
  %v43 = vrot.slane %v42, 2
  %v44 = vadd.f32 %v42, %v43
  %v45 = vrot.slane %v44, 1
  %v46 = vadd.f32 %v44, %v45
  %v47 = vmul.f32 %v14, %v14
  %v48 = vmul.f32 %v15, %v15
  %v51 = vcombine.high %v47, %v47
  %v52 = vcombine.high %v48, %v48
  %v55 = vsel %vm22, %v47, 0.0
  %v56 = vsel %vm22, %v51, 0.0
  %v57 = vadd.f32 %v55, %v56
  %58 = vadd.xlane.f32.xlu0 %v57
  %v59 = vpop.xlane.xlu0 %58
  %v60 = vsel %vm22, %v48, 0.0
  %v61 = vsel %vm22, %v52, 0.0
  %v62 = vadd.f32 %v60, %v61
  %63 = vadd.xlane.f32.xlu0 %v62
  %v64 = vpop.xlane.xlu0 %63
  %v65 = vsel %vm22, %v59, 0.0
  %v66 = vrot.slane %v65, 4
  %v67 = vadd.f32 %v65, %v66
  %v68 = vrot.slane %v67, 2
  %v69 = vadd.f32 %v67, %v68
  %v70 = vrot.slane %v69, 1
  %v71 = vadd.f32 %v69, %v70
  %v72 = vsel %vm22, %v64, 0.0
  %v73 = vrot.slane %v72, 4
  %v74 = vadd.f32 %v72, %v73
  %v75 = vrot.slane %v74, 2
  %v76 = vadd.f32 %v74, %v75
  %v77 = vrot.slane %v76, 1
  %v78 = vadd.f32 %v76, %v77
  %v79 = vmul.f32 %v39, 0.0009765625
  %v80 = vmul.f32 %v46, 0.0009765625
  %v81 = vmul.f32 %v71, 0.0009765625
  %v82 = vmul.f32 %v78, 0.0009765625
  %v83 = vmul.f32 %v79, %v79
  %v84 = vmul.f32 %v80, %v80
  %v85 = vsub.f32 %v81, %v83
  %v86 = vsub.f32 %v82, %v84
  %v87 = vmax.f32 %v85, 0.0
  %v88 = vmax.f32 %v86, 0.0
  %v89 = vadd.f32 %v87, 1e-05
  %v90 = vadd.f32 %v88, 1e-05
  %v91 = vrsqrt.pop %v89
  %v92 = vrsqrt.pop %v90
  %v93 = vld [vmem:[%s1] sm:$0xf]
  %v94 = vmul.f32 %v93, %v91
  %v95 = vmul.f32 %v93, %v92
  %v96 = vld [vmem:[%s2] sm:$0xf]
  %v97 = vmul.f32 %v79, %v94
  %v98 = vmul.f32 %v80, %v95
  %v99 = vsub.f32 %v96, %v97
  %v100 = vsub.f32 %v96, %v98
  %102 = vset.pattern.permute.xlu0 0
  %103 = vperm.xlu0 %102, %v94
  %v104 = vpop.permute.xlu0 %103
  %106 = vset.pattern.permute.xlu0 0
  %107 = vperm.xlu0 %106, %v95
  %v108 = vpop.permute.xlu0 %107
  %v110 = vunpack.c.l.s4 839922192
  %v111 = vunpack.c.0.s8 %v110
  %v112 = vlaneseq
  %v113 = vshrl.u32 %v112, 7
  %v114 = vsub.s32 %v111, %v113
  %v115 = vrot.slane %v104, %v114
  %v117 = vunpack.c.l.s4 839922192
  %v118 = vunpack.c.0.s8 %v117
  %v119 = vlaneseq
  %v120 = vshrl.u32 %v119, 7
  %v121 = vsub.s32 %v118, %v120
  %v122 = vrot.slane %v108, %v121
  %v125 = vmul.f32 %v14, %v115
  %v126 = vmul.f32 %v15, %v122
  %128 = vset.pattern.permute.xlu0 0
  %129 = vperm.xlu0 %128, %v99
  %v130 = vpop.permute.xlu0 %129
  %132 = vset.pattern.permute.xlu0 0
  %133 = vperm.xlu0 %132, %v100
  %v134 = vpop.permute.xlu0 %133
  %v136 = vunpack.c.l.s4 839922192
  %v137 = vunpack.c.0.s8 %v136
  %v138 = vlaneseq
  %v139 = vshrl.u32 %v138, 7
  %v140 = vsub.s32 %v137, %v139
  %v141 = vrot.slane %v130, %v140
  %v143 = vunpack.c.l.s4 839922192
  %v144 = vunpack.c.0.s8 %v143
  %v145 = vlaneseq
  %v146 = vshrl.u32 %v145, 7
  %v147 = vsub.s32 %v144, %v146
  %v148 = vrot.slane %v134, %v147
  %v151 = vadd.f32 %v125, %v141
  %v152 = vadd.f32 %v126, %v148
  %v153 = vmul.f32 %v151, %v151
  %v154 = vmul.f32 %v152, %v152
  %v155 = vmul.f32 %v151, %v153
  %v156 = vmul.f32 %v152, %v154
  %v157 = vmul.f32 %v155, 0.044715
  %v158 = vmul.f32 %v156, 0.044715
  %v159 = vadd.f32 %v151, %v157
  %v160 = vadd.f32 %v152, %v158
  %v161 = vmul.f32 %v159, 0.7978846
  %v162 = vmul.f32 %v160, 0.7978846
  %v163 = vtanh.pop %v161
  %v164 = vtanh.pop %v162
  %v165 = vadd.f32 %v163, 1.0
  %v166 = vadd.f32 %v164, 1.0
  %v167 = vmul.f32 %v165, 0.5
  %v168 = vmul.f32 %v166, 0.5
  %v169 = vmul.f32 %v151, %v167
  %v170 = vmul.f32 %v152, %v168
  %171 = vst [vmem:[%s3] sm:$0xff] %v169
  %172 = vst [vmem:[%s3 + $0x8] sm:$0xff] %v170
  // Predicated region
  $region14: #{groupnorm1.1} parent=0 // pred_check
    _
  $region15: #{groupnorm1.1} parent=0 // pred_check_branch
    %174 = sbr.rel (0) target = $region17
  $region16: #{groupnorm1.1} parent=0 // pred_region
    _
  $region17: #{groupnorm1.1} parent=0 // pred_fallthru
    _
  // Predicated region
  $region18: #{groupnorm1.1} parent=0 // pred_check
    _
  $region19: #{groupnorm1.1} parent=0 // pred_check_branch
    %176 = sbr.rel (0) target = $region21
  $region20: #{groupnorm1.1} parent=0 // pred_region
    _
  $region21: #{groupnorm1.1} parent=0 // pred_fallthru
    _

</llo_original>
